<compile_context>
chip_gen: v5e
topology: v5e:2x2
jax: 0.10.0
libtpu: 0.0.40
codegen_flags: <defaults>
</compile_context>

<pallas_src>
import jax
import jax.numpy as jnp
from jax.experimental import pallas as pl
from jax.experimental.pallas import tpu as pltpu


def _round_up(x, m):
    return (x + m - 1) // m * m


def _vmem_budget_bytes():
    # ~80% of physical VMEM: headroom for compiler-internal scratch.
    # v7x: 64 MiB -> ~51 MiB budget;  v5e/v6e: 128 MiB -> ~102 MiB budget.
    try:
        cap = int(pltpu.get_tpu_info().vmem_capacity_bytes)
    except Exception:
        cap = 64 << 20  # conservative default (v7x)
    return (cap * 4) // 5


def _fusion_kernel(p_ref, fs_ref, wt_ref, wb_ref, b_ref, o_ref):
    # Fused linear over the (virtually) concatenated feature dim:
    #   [P_flat | f_s] @ [W_top; W_bot] == P_flat @ W_top + f_s @ W_bot
    # Both dots accumulate in f32 on the MXU; bias + ReLU epilogue in f32.
    acc = jnp.dot(p_ref[...], wt_ref[...], preferred_element_type=jnp.float32)
    acc += jnp.dot(fs_ref[...], wb_ref[...], preferred_element_type=jnp.float32)
    acc += b_ref[...]
    o_ref[...] = jnp.maximum(acc, 0.0).astype(o_ref.dtype)


def feature_fusion(P, f_s, W, b, *, compute_dtype=None, use_kernel=None):
    """
    P   : [B, D, A]      physical prior
    f_s : [B, M]         sonar features
    W   : [D*A + M, K]   fused linear weight (transposed vs torch's [K, in])
    b   : [K]            bias
    returns h = relu(concat([P.reshape(B, -1), f_s], 1) @ W + b)  -> [B, K]

    compute_dtype: optional dtype for the two MXU streams (e.g. jnp.bfloat16);
                   accumulation / bias / ReLU stay f32. Outputs then match a
                   torch f32 reference only at compute_dtype input precision.
    use_kernel   : True/False to force; None = auto (plain XLA for tiny B,
                   where pallas launch/DMA overhead dominates the <10 KFLOP).
    """
    B, D, A = P.shape
    M = f_s.shape[1]
    DA = D * A
    F_in = DA + M
    K = W.shape[1]
    out_dtype = P.dtype

    p_flat = P.reshape(B, DA)  # contiguous reshape: free, no concat / no copy

    if use_kernel is None:
        use_kernel = B >= 128
    if not use_kernel:
        x = jnp.concatenate([p_flat, f_s], axis=1)
        Wc = W
        if compute_dtype is not None:
            x = x.astype(compute_dtype)
            Wc = W.astype(compute_dtype)
        y = jnp.dot(x, Wc, preferred_element_type=jnp.float32) + b
        return jnp.maximum(y, 0.0).astype(out_dtype)

    # Split the weight once at trace time (in production, pre-split / pre-pad
    # the weights outside the step function so this happens once, not per call).
    W_top = W[:DA, :]
    W_bot = W[DA:, :]
    if compute_dtype is not None:
        p_flat = p_flat.astype(compute_dtype)
        f_s = f_s.astype(compute_dtype)
        W_top = W_top.astype(compute_dtype)
        W_bot = W_bot.astype(compute_dtype)

    in_size = jnp.dtype(p_flat.dtype).itemsize
    out_size = jnp.dtype(out_dtype).itemsize
    budget = _vmem_budget_bytes()

    # ---- K (lane) tiling: lane-dense output; weights resident if they fit ----
    K_pad = _round_up(max(K, 128), 128)
    w_budget = budget // 3
    if F_in * K_pad * in_size <= w_budget:
        TK = K_pad                                   # whole padded weight resident
    else:
        TK = max(128, (w_budget // (F_in * in_size)) // 128 * 128)
        TK = min(TK, K_pad)
        K_pad = _round_up(K_pad, TK)                 # keep K_pad a multiple of TK
    nk = K_pad // TK
    wb_count = 1 if nk == 1 else 2                   # single-buffer resident weights

    # ---- batch (sublane) tiling ----
    sublane = {1: 32, 2: 16, 4: 8}.get(in_size, 8)   # packed dtypes tile sublanes in pairs/quads
    if B <= sublane:
        TB = B                                       # block == full batch dim (allowed)
    else:
        TB = min(1024, _round_up(min(B, 1024), sublane))

        def _vmem_need(tb):
            return (2 * tb * F_in * in_size          # P_flat + f_s tiles (double-buffered)
                    + 2 * tb * TK * out_size         # output tiles (double-buffered)
                    + wb_count * F_in * TK * in_size
                    + wb_count * TK * 4)             # bias stays f32

        while TB > sublane and 2 * _vmem_need(TB) > budget:
            TB = max(sublane, _round_up(TB // 2, sublane))
    nb = pl.cdiv(B, TB)

    # The contraction dim (DA / M) is intentionally left un-padded: lane-padding
    # it would re-introduce a full HBM pass over the activations, which costs
    # more than the ragged last vreg of each row in this memory-bound regime.
    W_top_p = jnp.pad(W_top, ((0, 0), (0, K_pad - K)))
    W_bot_p = jnp.pad(W_bot, ((0, 0), (0, K_pad - K)))
    b_pad = jnp.pad(b.astype(jnp.float32), (0, K_pad - K)).reshape(1, K_pad)

    vmem_need_total = (2 * TB * F_in * in_size + 2 * TB * TK * out_size
                       + wb_count * F_in * TK * in_size + wb_count * TK * 4)
    vmem_limit = int(min(max(2 * vmem_need_total, 4 << 20), budget))

    flops = 2 * B * F_in * K_pad
    bytes_accessed = (B * F_in * in_size                                   # activations read once
                      + (nb if nk > 1 else 1) * F_in * K_pad * in_size    # weights
                      + K_pad * 4
                      + B * K_pad * out_size)

    grid = (nb, nk)
    out_shape = jax.ShapeDtypeStruct((B, K_pad), out_dtype)
    out_spec = pl.BlockSpec((TB, TK), lambda i, j: (i, j))

    def _call(single_buffer_weights):
        w_kw = dict(pipeline_mode=pl.Buffered(1)) if single_buffer_weights else {}
        in_specs = [
            pl.BlockSpec((TB, DA), lambda i, j: (i, 0)),           # P_flat: batch-tiled
            pl.BlockSpec((TB, M), lambda i, j: (i, 0)),            # f_s:    batch-tiled
            pl.BlockSpec((DA, TK), lambda i, j: (0, j), **w_kw),   # W_top
            pl.BlockSpec((M, TK), lambda i, j: (0, j), **w_kw),    # W_bot
            pl.BlockSpec((1, TK), lambda i, j: (0, j), **w_kw),    # bias
        ]
        return pl.pallas_call(
            _fusion_kernel,
            out_shape=out_shape,
            grid=grid,
            in_specs=in_specs,
            out_specs=out_spec,
            compiler_params=pltpu.CompilerParams(
                # Both grid axes write disjoint output tiles; "parallel" lets
                # the batch axis shard across both TensorCores on v7x (no-op on
                # v5e/v6e).  NOTE: verify 2-TC split in an xprof trace; switch
                # to pltpu.CORE_PARALLEL if "parallel" does not split it.
                dimension_semantics=("parallel", "parallel"),
                vmem_limit_bytes=vmem_limit,
            ),
            cost_estimate=pl.CostEstimate(
                flops=flops, transcendentals=0, bytes_accessed=bytes_accessed),
        )(p_flat, f_s, W_top_p, W_bot_p, b_pad)

    single_buffer = (nk == 1)
    try:
        out = _call(single_buffer)
    except Exception:
        if not single_buffer:
            raise
        # pipeline_mode=pl.Buffered(1) not supported on this jax version:
        # fall back to default double buffering (correctness unchanged).
        out = _call(False)

    return out[:, :K]


if __name__ == "__main__":
    # Small shapes consistent with the module: B=2, D=4, A=8, M=16, K=32.
    B, D, A, M, K = 2, 4, 8, 16, 32
    key = jax.random.PRNGKey(0)
    k_p, k_fs, k_w, k_b = jax.random.split(key, 4)

    P = jax.random.normal(k_p, (B, D, A), dtype=jnp.float32)
    f_s = jax.random.normal(k_fs, (B, M), dtype=jnp.float32)

    # nn.Linear-style uniform init in [-1/sqrt(fan_in), 1/sqrt(fan_in)]
    fan_in = D * A + M
    bound = 1.0 / jnp.sqrt(jnp.float32(fan_in))
    W = jax.random.uniform(k_w, (fan_in, K), minval=-bound, maxval=bound,
                           dtype=jnp.float32)
    b = jax.random.uniform(k_b, (K,), minval=-bound, maxval=bound,
                           dtype=jnp.float32)

    # Force the Pallas path (auto-dispatch would use plain XLA at these sizes).
    h = feature_fusion(P, f_s, W, b, use_kernel=True)
    jax.block_until_ready(h)

    # Pure-JAX reference (concat + matmul + bias + relu)
    ref = jnp.maximum(
        jnp.concatenate([P.reshape(B, -1), f_s], axis=1) @ W + b, 0.0
    )
    assert h.shape == (B, K)
    assert jnp.allclose(h, ref, atol=1e-5, rtol=1e-5)

    # bf16 MXU streams with f32 accumulation (suggested production setting);
    # compared against a bf16-cast f32 reference.
    h_bf16 = feature_fusion(P, f_s, W, b, compute_dtype=jnp.bfloat16,
                            use_kernel=True)
    jax.block_until_ready(h_bf16)
    x_bf = jnp.concatenate([P.reshape(B, -1), f_s],
                           axis=1).astype(jnp.bfloat16).astype(jnp.float32)
    W_bf = W.astype(jnp.bfloat16).astype(jnp.float32)
    ref_bf = jnp.maximum(x_bf @ W_bf + b, 0.0)
    assert jnp.allclose(h_bf16, ref_bf, atol=2e-2, rtol=2e-2)

    print("KERNEL_OK")
</pallas_src>

<mosaic_0001>
module attributes {stable_mosaic.version = 11 : i64} {
  func.func @_fusion_kernel(%arg0: i32, %arg1: i32, %arg2: memref<2x32xf32, #tpu.memory_space<vmem>>, %arg3: memref<2x16xf32, #tpu.memory_space<vmem>>, %arg4: memref<32x128xf32, #tpu.memory_space<vmem>>, %arg5: memref<16x128xf32, #tpu.memory_space<vmem>>, %arg6: memref<1x128xf32, #tpu.memory_space<vmem>>, %arg7: memref<2x128xf32, #tpu.memory_space<vmem>>) attributes {dimension_semantics = [#tpu.dimension_semantics<parallel>, #tpu.dimension_semantics<parallel>], iteration_bounds = array<i64: 1, 1>, scalar_prefetch = 0 : i64, scratch_operands = 0 : i64, tpu.core_type = #tpu.core_type<tc>, window_params = [{transform_indices = @transform_0, window_bounds = array<i64: 2, 32>}, {transform_indices = @transform_1, window_bounds = array<i64: 2, 16>}, {pipeline_mode = #tpu.pipeline_mode<synchronous>, transform_indices = @transform_2, window_bounds = array<i64: 32, 128>}, {pipeline_mode = #tpu.pipeline_mode<synchronous>, transform_indices = @transform_3, window_bounds = array<i64: 16, 128>}, {pipeline_mode = #tpu.pipeline_mode<synchronous>, transform_indices = @transform_4, window_bounds = array<i64: 1, 128>}, {transform_indices = @transform_5, window_bounds = array<i64: 2, 128>}]} {
    %c0 = arith.constant 0 : index
    %c0_0 = arith.constant 0 : index
    %0 = vector.load %arg2[%c0, %c0_0] : memref<2x32xf32, #tpu.memory_space<vmem>>, vector<2x32xf32>
    %c0_1 = arith.constant 0 : index
    %c0_2 = arith.constant 0 : index
    %1 = vector.load %arg4[%c0_1, %c0_2] : memref<32x128xf32, #tpu.memory_space<vmem>>, vector<32x128xf32>
    %cst = arith.constant dense<0.000000e+00> : vector<2x128xf32>
    %2 = tpu.matmul %0, %1, %cst {dimension_numbers = #tpu.dot_dimension_numbers<[1], [0], [0], [1], [0, 0, 1, 1], [], []>} : vector<2x32xf32>, vector<32x128xf32>, vector<2x128xf32> -> vector<2x128xf32>
    %c0_3 = arith.constant 0 : index
    %c0_4 = arith.constant 0 : index
    %3 = vector.load %arg3[%c0_3, %c0_4] : memref<2x16xf32, #tpu.memory_space<vmem>>, vector<2x16xf32>
    %c0_5 = arith.constant 0 : index
    %c0_6 = arith.constant 0 : index
    %4 = vector.load %arg5[%c0_5, %c0_6] : memref<16x128xf32, #tpu.memory_space<vmem>>, vector<16x128xf32>
    %cst_7 = arith.constant dense<0.000000e+00> : vector<2x128xf32>
    %5 = tpu.matmul %3, %4, %cst_7 {dimension_numbers = #tpu.dot_dimension_numbers<[1], [0], [0], [1], [0, 0, 1, 1], [], []>} : vector<2x16xf32>, vector<16x128xf32>, vector<2x128xf32> -> vector<2x128xf32>
    %6 = arith.addf %2, %5 : vector<2x128xf32>
    %c0_8 = arith.constant 0 : index
    %c0_9 = arith.constant 0 : index
    %7 = vector.load %arg6[%c0_8, %c0_9] : memref<1x128xf32, #tpu.memory_space<vmem>>, vector<1x128xf32>
    %8 = vector.broadcast %7 : vector<1x128xf32> to vector<2x128xf32>
    %9 = arith.addf %6, %8 : vector<2x128xf32>
    %cst_10 = arith.constant 0.000000e+00 : f32
    %10 = vector.broadcast %cst_10 : f32 to vector<2x128xf32>
    %11 = arith.maximumf %9, %10 : vector<2x128xf32>
    %c0_11 = arith.constant 0 : index
    %c0_12 = arith.constant 0 : index
    %12 = vector.load %arg7[%c0_11, %c0_12] : memref<2x128xf32, #tpu.memory_space<vmem>>, vector<2x128xf32>
    tpu.vector_store %arg7[%c0_11, %c0_12], %11 {strides = array<i32>} : memref<2x128xf32, #tpu.memory_space<vmem>>, vector<2x128xf32>,
    return
  }
  func.func @transform_0(%arg0: i32, %arg1: i32) -> (i32, i32) {
    %c0_i32 = arith.constant 0 : i32
    %c0_i32_0 = arith.constant 0 : i32
    return %arg0, %c0_i32 : i32, i32
  }
  func.func @transform_1(%arg0: i32, %arg1: i32) -> (i32, i32) {
    %c0_i32 = arith.constant 0 : i32
    %c0_i32_0 = arith.constant 0 : i32
    return %arg0, %c0_i32 : i32, i32
  }
  func.func @transform_2(%arg0: i32, %arg1: i32) -> (i32, i32) {
    %c0_i32 = arith.constant 0 : i32
    %c0_i32_0 = arith.constant 0 : i32
    return %c0_i32, %arg1 : i32, i32
  }
  func.func @transform_3(%arg0: i32, %arg1: i32) -> (i32, i32) {
    %c0_i32 = arith.constant 0 : i32
    %c0_i32_0 = arith.constant 0 : i32
    return %c0_i32, %arg1 : i32, i32
  }
  func.func @transform_4(%arg0: i32, %arg1: i32) -> (i32, i32) {
    %c0_i32 = arith.constant 0 : i32
    %c0_i32_0 = arith.constant 0 : i32
    return %c0_i32, %arg1 : i32, i32
  }
  func.func @transform_5(%arg0: i32, %arg1: i32) -> (i32, i32) {
    %c0_i32 = arith.constant 0 : i32
    return %arg0, %arg1 : i32, i32
  }
}

module attributes {stable_mosaic.version = 11 : i64} {
  func.func @_fusion_kernel(%arg0: i32, %arg1: i32, %arg2: memref<2x32xf32, #tpu.memory_space<vmem>>, %arg3: memref<2x16xf32, #tpu.memory_space<vmem>>, %arg4: memref<32x128xf32, #tpu.memory_space<vmem>>, %arg5: memref<16x128xf32, #tpu.memory_space<vmem>>, %arg6: memref<1x128xf32, #tpu.memory_space<vmem>>, %arg7: memref<2x128xf32, #tpu.memory_space<vmem>>) attributes {dimension_semantics = [#tpu.dimension_semantics<parallel>, #tpu.dimension_semantics<parallel>], iteration_bounds = array<i64: 1, 1>, scalar_prefetch = 0 : i64, scratch_operands = 0 : i64, tpu.core_type = #tpu.core_type<tc>, window_params = [{transform_indices = @transform_0, window_bounds = array<i64: 2, 32>}, {transform_indices = @transform_1, window_bounds = array<i64: 2, 16>}, {transform_indices = @transform_2, window_bounds = array<i64: 32, 128>}, {transform_indices = @transform_3, window_bounds = array<i64: 16, 128>}, {transform_indices = @transform_4, window_bounds = array<i64: 1, 128>}, {transform_indices = @transform_5, window_bounds = array<i64: 2, 128>}]} {
    %c0 = arith.constant 0 : index
    %c0_0 = arith.constant 0 : index
    %0 = vector.load %arg2[%c0, %c0_0] : memref<2x32xf32, #tpu.memory_space<vmem>>, vector<2x32xf32>
    %c0_1 = arith.constant 0 : index
    %c0_2 = arith.constant 0 : index
    %1 = vector.load %arg4[%c0_1, %c0_2] : memref<32x128xf32, #tpu.memory_space<vmem>>, vector<32x128xf32>
    %cst = arith.constant dense<0.000000e+00> : vector<2x128xf32>
    %2 = tpu.matmul %0, %1, %cst {dimension_numbers = #tpu.dot_dimension_numbers<[1], [0], [0], [1], [0, 0, 1, 1], [], []>} : vector<2x32xf32>, vector<32x128xf32>, vector<2x128xf32> -> vector<2x128xf32>
    %c0_3 = arith.constant 0 : index
    %c0_4 = arith.constant 0 : index
    %3 = vector.load %arg3[%c0_3, %c0_4] : memref<2x16xf32, #tpu.memory_space<vmem>>, vector<2x16xf32>
    %c0_5 = arith.constant 0 : index
    %c0_6 = arith.constant 0 : index
    %4 = vector.load %arg5[%c0_5, %c0_6] : memref<16x128xf32, #tpu.memory_space<vmem>>, vector<16x128xf32>
    %cst_7 = arith.constant dense<0.000000e+00> : vector<2x128xf32>
    %5 = tpu.matmul %3, %4, %cst_7 {dimension_numbers = #tpu.dot_dimension_numbers<[1], [0], [0], [1], [0, 0, 1, 1], [], []>} : vector<2x16xf32>, vector<16x128xf32>, vector<2x128xf32> -> vector<2x128xf32>
    %6 = arith.addf %2, %5 : vector<2x128xf32>
    %c0_8 = arith.constant 0 : index
    %c0_9 = arith.constant 0 : index
    %7 = vector.load %arg6[%c0_8, %c0_9] : memref<1x128xf32, #tpu.memory_space<vmem>>, vector<1x128xf32>
    %8 = vector.broadcast %7 : vector<1x128xf32> to vector<2x128xf32>
    %9 = arith.addf %6, %8 : vector<2x128xf32>
    %cst_10 = arith.constant 0.000000e+00 : f32
    %10 = vector.broadcast %cst_10 : f32 to vector<2x128xf32>
    %11 = arith.maximumf %9, %10 : vector<2x128xf32>
    %c0_11 = arith.constant 0 : index
    %c0_12 = arith.constant 0 : index
    %12 = vector.load %arg7[%c0_11, %c0_12] : memref<2x128xf32, #tpu.memory_space<vmem>>, vector<2x128xf32>
    tpu.vector_store %arg7[%c0_11, %c0_12], %11 {strides = array<i32>} : memref<2x128xf32, #tpu.memory_space<vmem>>, vector<2x128xf32>,
    return
  }
  func.func @transform_0(%arg0: i32, %arg1: i32) -> (i32, i32) {
    %c0_i32 = arith.constant 0 : i32
    %c0_i32_0 = arith.constant 0 : i32
    return %arg0, %c0_i32 : i32, i32
  }
  func.func @transform_1(%arg0: i32, %arg1: i32) -> (i32, i32) {
    %c0_i32 = arith.constant 0 : i32
    %c0_i32_0 = arith.constant 0 : i32
    return %arg0, %c0_i32 : i32, i32
  }
  func.func @transform_2(%arg0: i32, %arg1: i32) -> (i32, i32) {
    %c0_i32 = arith.constant 0 : i32
    %c0_i32_0 = arith.constant 0 : i32
    return %c0_i32, %arg1 : i32, i32
  }
  func.func @transform_3(%arg0: i32, %arg1: i32) -> (i32, i32) {
    %c0_i32 = arith.constant 0 : i32
    %c0_i32_0 = arith.constant 0 : i32
    return %c0_i32, %arg1 : i32, i32
  }
  func.func @transform_4(%arg0: i32, %arg1: i32) -> (i32, i32) {
    %c0_i32 = arith.constant 0 : i32
    %c0_i32_0 = arith.constant 0 : i32
    return %c0_i32, %arg1 : i32, i32
  }
  func.func @transform_5(%arg0: i32, %arg1: i32) -> (i32, i32) {
    %c0_i32 = arith.constant 0 : i32
    return %arg0, %arg1 : i32, i32
  }
}

</mosaic_0001>

<llo_original>
// kernel: tpu_custom_call.1
$region0: #{tpu_custom_call.1}
  #allocation0 [shape = 'u32[]', space=smem, size = 0x4, offset = 0x4, fixed_abs, tag = 'smem constant byte address 0x4 - core index']
  #allocation1 [shape = 'u32[72,128]{1,0:T(1,128)}', space=vmem, size = 0x9000, scoped, tag = 'internal scratch']
  %s0 = inlined_call_operand.hbm [shape: f32[2,32], index: 0, kind: input, shape index: {}]
  %s1 = inlined_call_operand.hbm [shape: f32[2,16], index: 1, kind: input, shape index: {}]
  %s2 = inlined_call_operand.hbm [shape: f32[32,128], index: 2, kind: input, shape index: {}]
  %s3 = inlined_call_operand.hbm [shape: f32[16,128], index: 3, kind: input, shape index: {}]
  %s4 = inlined_call_operand.vmem [shape: f32[1,128], index: 4, kind: input, shape index: {}]
  %s5 = inlined_call_operand.hbm [shape: f32[2,128], index: 5, kind: output, shape index: {}]
  %s6 = sld [smem:[#allocation0]]
  $region46: #{tpu_custom_call.1} parent=0
    _
  %s8 = ssub.s32 1, %s6
  %s9 = scalar_select 0, %s8, %s6
  $region1: #{tpu_custom_call.1} parent=0
    #allocation2 [shape = 'u8[1024]{0}', space=vmem, size = 0x400, scoped, tag = 'input window, operand 0, single buffered']
    #allocation3 [shape = 's32[1]{0}', space=sflag, size = 0x4, scoped, tag = 'scoped memory for tpu_custom_call.1']
    #allocation4 [shape = 's32[1]{0}', space=sflag, size = 0x4, scoped, tag = 'scoped memory for tpu_custom_call.1']
    #allocation5 [shape = 'u8[1024]{0}', space=vmem, size = 0x400, scoped, tag = 'input window, operand 1, single buffered']
    #allocation6 [shape = 's32[1]{0}', space=sflag, size = 0x4, scoped, tag = 'scoped memory for tpu_custom_call.1']
    #allocation7 [shape = 'u8[16384]{0}', space=vmem, size = 0x4000, scoped, tag = 'input window, operand 2, single buffered']
    #allocation8 [shape = 'u8[8192]{0}', space=vmem, size = 0x2000, scoped, tag = 'input window, operand 3, single buffered']
    #allocation9 [shape = 's32[1]{0}', space=sflag, size = 0x4, scoped, tag = 'scoped memory for tpu_custom_call.1']
    #allocation10 [shape = 'u8[1024]{0}', space=vmem, size = 0x400, scoped, tag = 'output window, operand 0, single buffered']
    %10 = vsyncpa [#allocation3], 0
    %11 = vsyncpa [#allocation6], 0
    %12 = vsyncpa [#allocation9], 0
    %13 = vsyncpa [#allocation4], 0
    // Predicated region
    $region2: #{tpu_custom_call.1} parent=1 // pred_check
      _
    $region3: #{tpu_custom_call.1} parent=1 // pred_check_branch
      %15 = sbr.rel (0) target = $region5
    $region4: #{tpu_custom_call.1} parent=1 // pred_region
      %17 = vsyncadd [#allocation3], 0
      %s19 = sshll.u32 %s0, 4
      %s20 = int_to_ptr.hbm [resolvable:$true] %s19
      %s21 = sshll.u32 [#allocation2], 4
      %s22 = int_to_ptr.vmem [resolvable:$true] %s21
      %24 = dma.hbm_to_vmem [thread:$0]  %s20, 32, %s22, [#allocation3]
    $region5: #{tpu_custom_call.1} parent=1 // pred_fallthru
      _
    // Predicated region
    $region6: #{tpu_custom_call.1} parent=1 // pred_check
      _
    $region7: #{tpu_custom_call.1} parent=1 // pred_check_branch
      %26 = sbr.rel (0) target = $region9
    $region8: #{tpu_custom_call.1} parent=1 // pred_region
      %28 = vsyncadd [#allocation6], 0
      %s30 = sshll.u32 %s1, 4
      %s31 = int_to_ptr.hbm [resolvable:$true] %s30
      %s32 = sshll.u32 [#allocation5], 4
      %s33 = int_to_ptr.vmem [resolvable:$true] %s32
      %35 = dma.hbm_to_vmem [thread:$0]  %s31, 32, %s33, [#allocation6]
    $region9: #{tpu_custom_call.1} parent=1 // pred_fallthru
      _
    // Predicated region
    $region10: #{tpu_custom_call.1} parent=1 // pred_check
      _
    $region11: #{tpu_custom_call.1} parent=1 // pred_check_branch
      %37 = sbr.rel (0) target = $region13
    $region12: #{tpu_custom_call.1} parent=1 // pred_region
      %39 = vsyncadd [#allocation6], 0
      %s40 = sshll.u32 %s2, 4
      %s41 = int_to_ptr.hbm [resolvable:$true] %s40
      %s42 = sshll.u32 [#allocation7], 4
      %s43 = int_to_ptr.vmem [resolvable:$true] %s42
      %48 = dma.hbm_to_vmem [thread:$0]  %s41, 512, %s43, [#allocation6], 128, 128, 8
    $region13: #{tpu_custom_call.1} parent=1 // pred_fallthru
      _
    // Predicated region
    $region14: #{tpu_custom_call.1} parent=1 // pred_check
      _
    $region15: #{tpu_custom_call.1} parent=1 // pred_check_branch
      %50 = sbr.rel (0) target = $region17
    $region16: #{tpu_custom_call.1} parent=1 // pred_region
      %52 = vsyncadd [#allocation9], 0
      %s53 = sshll.u32 %s3, 4
      %s54 = int_to_ptr.hbm [resolvable:$true] %s53
      %s55 = sshll.u32 [#allocation8], 4
      %s56 = int_to_ptr.vmem [resolvable:$true] %s55
      %61 = dma.hbm_to_vmem [thread:$0]  %s54, 256, %s56, [#allocation9], 128, 128, 8
    $region17: #{tpu_custom_call.1} parent=1 // pred_fallthru
      _
    // Predicated region
    $region18: #{tpu_custom_call.1} parent=1 // pred_check
      _
    $region19: #{tpu_custom_call.1} parent=1 // pred_check_branch
      %63 = sbr.rel (0) target = $region21
    $region20: #{tpu_custom_call.1} parent=1 // pred_region
      _
    $region21: #{tpu_custom_call.1} parent=1 // pred_fallthru
      _
    // Predicated region
    $region22: #{tpu_custom_call.1} parent=1 // pred_check
      _
    $region23: #{tpu_custom_call.1} parent=1 // pred_check_branch
      %65 = sbr.rel (0) target = $region25
    $region24: #{tpu_custom_call.1} parent=1 // pred_region
      %67 = dma.done [#allocation3], 32
    $region25: #{tpu_custom_call.1} parent=1 // pred_fallthru
      _
    // Predicated region
    $region26: #{tpu_custom_call.1} parent=1 // pred_check
      _
    $region27: #{tpu_custom_call.1} parent=1 // pred_check_branch
      %69 = sbr.rel (0) target = $region29
    $region28: #{tpu_custom_call.1} parent=1 // pred_region
      %71 = dma.done [#allocation6], 32
    $region29: #{tpu_custom_call.1} parent=1 // pred_fallthru
      _
    // Predicated region
    $region30: #{tpu_custom_call.1} parent=1 // pred_check
      _
    $region31: #{tpu_custom_call.1} parent=1 // pred_check_branch
      %73 = sbr.rel (0) target = $region33
    $region32: #{tpu_custom_call.1} parent=1 // pred_region
      %75 = dma.done [#allocation6], 512
    $region33: #{tpu_custom_call.1} parent=1 // pred_fallthru
      _
    // Predicated region
    $region34: #{tpu_custom_call.1} parent=1 // pred_check
      _
    $region35: #{tpu_custom_call.1} parent=1 // pred_check_branch
      %77 = sbr.rel (0) target = $region37
    $region36: #{tpu_custom_call.1} parent=1 // pred_region
      %79 = dma.done [#allocation9], 256
    $region37: #{tpu_custom_call.1} parent=1 // pred_fallthru
      _
    %v80 = vld [vmem:[#allocation2] sm:$0x3]
    %v81 = vld [vmem:[#allocation7] sm:$0xff]
    %v82 = vld [vmem:[#allocation7 + $0x8] sm:$0xff]
    %v83 = vld [vmem:[#allocation7 + $0x10] sm:$0xff]
    %v84 = vld [vmem:[#allocation7 + $0x18] sm:$0xff]
    %v85 = vld [vmem:[#allocation5] sm:$0x3]
    %v86 = vld [vmem:[#allocation8] sm:$0xff]
    %v87 = vld [vmem:[#allocation8 + $0x8] sm:$0xff]
    %vm88 = vcmask 130048
    %v90 = vsel %vm88, %v85, 0
    %92 = vmatpush.msra.mxu0 0.0
    %93 = vmatpush.msra.mxu0 0.0
    %94 = vmatpush.msra.mxu0 0.0
    %95 = vmatpush.msra.mxu0 0.0
    %96 = vmatpush.msra.mxu0 0.0
    %97 = vmatpush.msra.mxu0 0.0
    %98 = vmatpush.msra.mxu0 0.0
    %99 = vmatpush.msra.mxu0 0.0
    %100 = vmatpush.msra.mxu0 0.0
    %101 = vmatpush.msra.mxu0 0.0
    %102 = vmatpush.msra.mxu0 0.0
    %103 = vmatpush.msra.mxu0 0.0
    %104 = vmatpush.msra.mxu0 0.0
    %105 = vmatpush.msra.mxu0 0.0
    %106 = vmatpush.msra.mxu0 %v87
    %107 = vmatpush.msra.mxu0 %v86
    %108 = vmatmul.f32.gmra.mxu0 %v90
    %v109 = vpop.f32.mrf.mxu0
    %v110 = vadd.f32 0.0, %v109
    %111 = vdwg.mxu0
    %vm112 = vcmask 261120
    %v114 = vsel %vm112, %v80, 0
    %116 = vmatpush.msra.mxu0 0.0
    %117 = vmatpush.msra.mxu0 0.0
    %118 = vmatpush.msra.mxu0 0.0
    %119 = vmatpush.msra.mxu0 0.0
    %120 = vmatpush.msra.mxu0 0.0
    %121 = vmatpush.msra.mxu0 0.0
    %122 = vmatpush.msra.mxu0 0.0
    %123 = vmatpush.msra.mxu0 0.0
    %124 = vmatpush.msra.mxu0 0.0
    %125 = vmatpush.msra.mxu0 0.0
    %126 = vmatpush.msra.mxu0 0.0
    %127 = vmatpush.msra.mxu0 0.0
    %128 = vmatpush.msra.mxu0 %v84
    %129 = vmatpush.msra.mxu0 %v83
    %130 = vmatpush.msra.mxu0 %v82
    %131 = vmatpush.msra.mxu0 %v81
    %132 = vmatmul.f32.gmra.mxu0 %v114
    %v133 = vpop.f32.mrf.mxu0
    %v134 = vadd.f32 %v110, %v133
    %135 = vdwg.mxu0
    %v136 = vld [vmem:[%s4] sm:$0x1]
    %v138 = vperm.slane %v136, 0
    %v140 = vadd.f32 %v134, %v138
    %v141 = vmax.f32 %v140, 0.0
    %142 = vst [vmem:[#allocation10] sm:$0x3] %v141
    // Predicated region
    $region38: #{tpu_custom_call.1} parent=1 // pred_check
      _
    $region39: #{tpu_custom_call.1} parent=1 // pred_check_branch
      %144 = sbr.rel (0) target = $region41
    $region40: #{tpu_custom_call.1} parent=1 // pred_region
      %146 = vsyncadd [#allocation4], 0
      %s148 = sshll.u32 [#allocation10], 4
      %s149 = int_to_ptr.vmem [resolvable:$true] %s148
      %s150 = sshll.u32 %s5, 4
      %s151 = int_to_ptr.hbm [resolvable:$true] %s150
      %153 = dma.vmem_to_hbm [thread:$0]  %s149, 32, %s151, [#allocation4]
    $region41: #{tpu_custom_call.1} parent=1 // pred_fallthru
      _
    // Predicated region
    $region42: #{tpu_custom_call.1} parent=1 // pred_check
      _
    $region43: #{tpu_custom_call.1} parent=1 // pred_check_branch
      %155 = sbr.rel (0) target = $region45
    $region44: #{tpu_custom_call.1} parent=1 // pred_region
      %157 = dma.done [#allocation4], 32
    $region45: #{tpu_custom_call.1} parent=1 // pred_fallthru
      _
    %158 = vsyncpa [#allocation3], 1
    %159 = vsyncpa [#allocation6], 1
    %160 = vsyncpa [#allocation9], 1
    %161 = vsyncpa [#allocation4], 1

// kernel: tpu_custom_call.1
$region0: #{tpu_custom_call.1}
  #allocation0 [shape = 'u32[]', space=smem, size = 0x4, offset = 0x4, fixed_abs, tag = 'smem constant byte address 0x4 - core index']
  #allocation1 [shape = 'u32[72,128]{1,0:T(1,128)}', space=vmem, size = 0x9000, scoped, tag = 'internal scratch']
  %s0 = inlined_call_operand.hbm [shape: f32[2,32], index: 0, kind: input, shape index: {}]
  %s1 = inlined_call_operand.hbm [shape: f32[2,16], index: 1, kind: input, shape index: {}]
  %s2 = inlined_call_operand.hbm [shape: f32[32,128], index: 2, kind: input, shape index: {}]
  %s3 = inlined_call_operand.hbm [shape: f32[16,128], index: 3, kind: input, shape index: {}]
  %s4 = inlined_call_operand.vmem [shape: f32[1,128], index: 4, kind: input, shape index: {}]
  %s5 = inlined_call_operand.hbm [shape: f32[2,128], index: 5, kind: output, shape index: {}]
  %s6 = sld [smem:[#allocation0]]
  $region46: #{tpu_custom_call.1} parent=0
    _
  %s8 = ssub.s32 1, %s6
  %s9 = scalar_select 0, %s8, %s6
  $region1: #{tpu_custom_call.1} parent=0
    #allocation2 [shape = 'u8[1024]{0}', space=vmem, size = 0x400, scoped, tag = 'input window, operand 0, single buffered']
    #allocation3 [shape = 's32[1]{0}', space=sflag, size = 0x4, scoped, tag = 'scoped memory for tpu_custom_call.1']
    #allocation4 [shape = 's32[1]{0}', space=sflag, size = 0x4, scoped, tag = 'scoped memory for tpu_custom_call.1']
    #allocation5 [shape = 'u8[1024]{0}', space=vmem, size = 0x400, scoped, tag = 'input window, operand 1, single buffered']
    #allocation6 [shape = 's32[1]{0}', space=sflag, size = 0x4, scoped, tag = 'scoped memory for tpu_custom_call.1']
    #allocation7 [shape = 'u8[16384]{0}', space=vmem, size = 0x4000, scoped, tag = 'input window, operand 2, single buffered']
    #allocation8 [shape = 'u8[8192]{0}', space=vmem, size = 0x2000, scoped, tag = 'input window, operand 3, single buffered']
    #allocation9 [shape = 's32[1]{0}', space=sflag, size = 0x4, scoped, tag = 'scoped memory for tpu_custom_call.1']
    #allocation10 [shape = 'u8[1024]{0}', space=vmem, size = 0x400, scoped, tag = 'output window, operand 0, single buffered']
    %10 = vsyncpa [#allocation3], 0
    %11 = vsyncpa [#allocation6], 0
    %12 = vsyncpa [#allocation9], 0
    %13 = vsyncpa [#allocation4], 0
    // Predicated region
    $region2: #{tpu_custom_call.1} parent=1 // pred_check
      _
    $region3: #{tpu_custom_call.1} parent=1 // pred_check_branch
      %15 = sbr.rel (0) target = $region5
    $region4: #{tpu_custom_call.1} parent=1 // pred_region
      %17 = vsyncadd [#allocation3], 0
      %s19 = sshll.u32 %s0, 4
      %s20 = int_to_ptr.hbm [resolvable:$true] %s19
      %s21 = sshll.u32 [#allocation2], 4
      %s22 = int_to_ptr.vmem [resolvable:$true] %s21
      %24 = dma.hbm_to_vmem [thread:$0]  %s20, 32, %s22, [#allocation3]
    $region5: #{tpu_custom_call.1} parent=1 // pred_fallthru
      _
    // Predicated region
    $region6: #{tpu_custom_call.1} parent=1 // pred_check
      _
    $region7: #{tpu_custom_call.1} parent=1 // pred_check_branch
      %26 = sbr.rel (0) target = $region9
    $region8: #{tpu_custom_call.1} parent=1 // pred_region
      %28 = vsyncadd [#allocation6], 0
      %s30 = sshll.u32 %s1, 4
      %s31 = int_to_ptr.hbm [resolvable:$true] %s30
      %s32 = sshll.u32 [#allocation5], 4
      %s33 = int_to_ptr.vmem [resolvable:$true] %s32
      %35 = dma.hbm_to_vmem [thread:$0]  %s31, 32, %s33, [#allocation6]
    $region9: #{tpu_custom_call.1} parent=1 // pred_fallthru
      _
    // Predicated region
    $region10: #{tpu_custom_call.1} parent=1 // pred_check
      _
    $region11: #{tpu_custom_call.1} parent=1 // pred_check_branch
      %37 = sbr.rel (0) target = $region13
    $region12: #{tpu_custom_call.1} parent=1 // pred_region
      %39 = vsyncadd [#allocation6], 0
      %s40 = sshll.u32 %s2, 4
      %s41 = int_to_ptr.hbm [resolvable:$true] %s40
      %s42 = sshll.u32 [#allocation7], 4
      %s43 = int_to_ptr.vmem [resolvable:$true] %s42
      %48 = dma.hbm_to_vmem [thread:$0]  %s41, 512, %s43, [#allocation6], 128, 128, 8
    $region13: #{tpu_custom_call.1} parent=1 // pred_fallthru
      _
    // Predicated region
    $region14: #{tpu_custom_call.1} parent=1 // pred_check
      _
    $region15: #{tpu_custom_call.1} parent=1 // pred_check_branch
      %50 = sbr.rel (0) target = $region17
    $region16: #{tpu_custom_call.1} parent=1 // pred_region
      %52 = vsyncadd [#allocation9], 0
      %s53 = sshll.u32 %s3, 4
      %s54 = int_to_ptr.hbm [resolvable:$true] %s53
      %s55 = sshll.u32 [#allocation8], 4
      %s56 = int_to_ptr.vmem [resolvable:$true] %s55
      %61 = dma.hbm_to_vmem [thread:$0]  %s54, 256, %s56, [#allocation9], 128, 128, 8
    $region17: #{tpu_custom_call.1} parent=1 // pred_fallthru
      _
    // Predicated region
    $region18: #{tpu_custom_call.1} parent=1 // pred_check
      _
    $region19: #{tpu_custom_call.1} parent=1 // pred_check_branch
      %63 = sbr.rel (0) target = $region21
    $region20: #{tpu_custom_call.1} parent=1 // pred_region
      _
    $region21: #{tpu_custom_call.1} parent=1 // pred_fallthru
      _
    // Predicated region
    $region22: #{tpu_custom_call.1} parent=1 // pred_check
      _
    $region23: #{tpu_custom_call.1} parent=1 // pred_check_branch
      %65 = sbr.rel (0) target = $region25
    $region24: #{tpu_custom_call.1} parent=1 // pred_region
      %67 = dma.done [#allocation3], 32
    $region25: #{tpu_custom_call.1} parent=1 // pred_fallthru
      _
    // Predicated region
    $region26: #{tpu_custom_call.1} parent=1 // pred_check
      _
    $region27: #{tpu_custom_call.1} parent=1 // pred_check_branch
      %69 = sbr.rel (0) target = $region29
    $region28: #{tpu_custom_call.1} parent=1 // pred_region
      %71 = dma.done [#allocation6], 32
    $region29: #{tpu_custom_call.1} parent=1 // pred_fallthru
      _
    // Predicated region
    $region30: #{tpu_custom_call.1} parent=1 // pred_check
      _
    $region31: #{tpu_custom_call.1} parent=1 // pred_check_branch
      %73 = sbr.rel (0) target = $region33
    $region32: #{tpu_custom_call.1} parent=1 // pred_region
      %75 = dma.done [#allocation6], 512
    $region33: #{tpu_custom_call.1} parent=1 // pred_fallthru
      _
    // Predicated region
    $region34: #{tpu_custom_call.1} parent=1 // pred_check
      _
    $region35: #{tpu_custom_call.1} parent=1 // pred_check_branch
      %77 = sbr.rel (0) target = $region37
    $region36: #{tpu_custom_call.1} parent=1 // pred_region
      %79 = dma.done [#allocation9], 256
    $region37: #{tpu_custom_call.1} parent=1 // pred_fallthru
      _
    %v80 = vld [vmem:[#allocation2] sm:$0x3]
    %v81 = vld [vmem:[#allocation7] sm:$0xff]
    %v82 = vld [vmem:[#allocation7 + $0x8] sm:$0xff]
    %v83 = vld [vmem:[#allocation7 + $0x10] sm:$0xff]
    %v84 = vld [vmem:[#allocation7 + $0x18] sm:$0xff]
    %v85 = vld [vmem:[#allocation5] sm:$0x3]
    %v86 = vld [vmem:[#allocation8] sm:$0xff]
    %v87 = vld [vmem:[#allocation8 + $0x8] sm:$0xff]
    %vm88 = vcmask 130048
    %v90 = vsel %vm88, %v85, 0
    %92 = vmatpush.msra.mxu0 0.0
    %93 = vmatpush.msra.mxu0 0.0
    %94 = vmatpush.msra.mxu0 0.0
    %95 = vmatpush.msra.mxu0 0.0
    %96 = vmatpush.msra.mxu0 0.0
    %97 = vmatpush.msra.mxu0 0.0
    %98 = vmatpush.msra.mxu0 0.0
    %99 = vmatpush.msra.mxu0 0.0
    %100 = vmatpush.msra.mxu0 0.0
    %101 = vmatpush.msra.mxu0 0.0
    %102 = vmatpush.msra.mxu0 0.0
    %103 = vmatpush.msra.mxu0 0.0
    %104 = vmatpush.msra.mxu0 0.0
    %105 = vmatpush.msra.mxu0 0.0
    %106 = vmatpush.msra.mxu0 %v87
    %107 = vmatpush.msra.mxu0 %v86
    %108 = vmatmul.f32.gmra.mxu0 %v90
    %v109 = vpop.f32.mrf.mxu0
    %v110 = vadd.f32 0.0, %v109
    %111 = vdwg.mxu0
    %vm112 = vcmask 261120
    %v114 = vsel %vm112, %v80, 0
    %116 = vmatpush.msra.mxu0 0.0
    %117 = vmatpush.msra.mxu0 0.0
    %118 = vmatpush.msra.mxu0 0.0
    %119 = vmatpush.msra.mxu0 0.0
    %120 = vmatpush.msra.mxu0 0.0
    %121 = vmatpush.msra.mxu0 0.0
    %122 = vmatpush.msra.mxu0 0.0
    %123 = vmatpush.msra.mxu0 0.0
    %124 = vmatpush.msra.mxu0 0.0
    %125 = vmatpush.msra.mxu0 0.0
    %126 = vmatpush.msra.mxu0 0.0
    %127 = vmatpush.msra.mxu0 0.0
    %128 = vmatpush.msra.mxu0 %v84
    %129 = vmatpush.msra.mxu0 %v83
    %130 = vmatpush.msra.mxu0 %v82
    %131 = vmatpush.msra.mxu0 %v81
    %132 = vmatmul.f32.gmra.mxu0 %v114
    %v133 = vpop.f32.mrf.mxu0
    %v134 = vadd.f32 %v110, %v133
    %135 = vdwg.mxu0
    %v136 = vld [vmem:[%s4] sm:$0x1]
    %v138 = vperm.slane %v136, 0
    %v140 = vadd.f32 %v134, %v138
    %v141 = vmax.f32 %v140, 0.0
    %142 = vst [vmem:[#allocation10] sm:$0x3] %v141
    // Predicated region
    $region38: #{tpu_custom_call.1} parent=1 // pred_check
      _
    $region39: #{tpu_custom_call.1} parent=1 // pred_check_branch
      %144 = sbr.rel (0) target = $region41
    $region40: #{tpu_custom_call.1} parent=1 // pred_region
      %146 = vsyncadd [#allocation4], 0
      %s148 = sshll.u32 [#allocation10], 4
      %s149 = int_to_ptr.vmem [resolvable:$true] %s148
      %s150 = sshll.u32 %s5, 4
      %s151 = int_to_ptr.hbm [resolvable:$true] %s150
      %153 = dma.vmem_to_hbm [thread:$0]  %s149, 32, %s151, [#allocation4]
    $region41: #{tpu_custom_call.1} parent=1 // pred_fallthru
      _
    // Predicated region
    $region42: #{tpu_custom_call.1} parent=1 // pred_check
      _
    $region43: #{tpu_custom_call.1} parent=1 // pred_check_branch
      %155 = sbr.rel (0) target = $region45
    $region44: #{tpu_custom_call.1} parent=1 // pred_region
      %157 = dma.done [#allocation4], 32
    $region45: #{tpu_custom_call.1} parent=1 // pred_fallthru
      _
    %158 = vsyncpa [#allocation3], 1
    %159 = vsyncpa [#allocation6], 1
    %160 = vsyncpa [#allocation9], 1
    %161 = vsyncpa [#allocation4], 1

</llo_original>
